<compile_context>
chip_gen: v7x
topology: tpu7x:2x2x1
jax: 0.10.0
libtpu: 0.0.40
codegen_flags: <defaults>
</compile_context>

<pallas_src>
import functools

import jax
import jax.numpy as jnp
from jax.experimental import pallas as pl
from jax.experimental.pallas import tpu as pltpu


def _cdiv(a: int, b: int) -> int:
    return -(-a // b)


def _round_up(a: int, b: int) -> int:
    return _cdiv(a, b) * b


def _device_kind() -> str:
    try:
        return jax.devices()[0].device_kind.lower()
    except Exception:  # pragma: no cover - non-TPU / uninitialized backend
        return ""


def _num_core_splits(kind: str) -> int:
    # 2 TensorCores per chip/device: v2/v3/v4/v5p and v7-class parts.
    if any(tag in kind for tag in ("v2", "v3", "v4", "v5p", "7")):
        return 2
    return 1


def _gen_params(kind: str):
    """(target input-block bytes, vmem_limit_bytes) per TPU generation."""
    if "7" in kind:                      # v7x: 64 MiB physical VMEM per core
        return 4 * 1024 * 1024, 48 * 1024 * 1024
    return 8 * 1024 * 1024, 64 * 1024 * 1024   # v5e/v6e: 128 MiB physical


def _block_sizes(n, hw, itemsize, n_splits, block_bytes, chunk_bytes):
    """Pick (tb, tb_c, n_chunks, steps) for blocks of shape (tb, hw)."""
    sub = {1: 32, 2: 16}.get(itemsize, 8)        # dtype-correct sublane multiple
    hw_pad = _round_up(hw, 128)
    row_in = hw_pad * itemsize                   # padded bytes of one image (input dtype)
    row_f32 = hw_pad * 4                         # padded bytes of one image as f32 temp

    tb_cap = max(1, block_bytes // row_in)
    tb = min(tb_cap, _cdiv(n, n_splits))
    tb = min(_round_up(tb, sub), n)              # sublane-aligned OR equal to full dim

    chunk_cap = max(1, chunk_bytes // row_f32)   # bound the in-kernel f32 temporaries
    if chunk_cap >= tb:
        tb_c = tb
    else:
        tb_c = min(tb, max(sub, (chunk_cap // sub) * sub))
        tb = max(tb_c, (tb // tb_c) * tb_c)      # make tb a multiple of tb_c
    n_chunks = tb // tb_c

    steps = _cdiv(n, n_splits * tb)
    return tb, tb_c, n_chunks, steps


def _tv_kernel(x_ref, hv_ref, wv_ref, *, n, w, hw, tb, tb_c, n_chunks, steps, exact):
    """One grid step over a (tb, H*W) slab of flattened images.

    x_ref  : (tb, H*W)       input slab, native dtype (contiguous HBM region).
    hv_ref : (1, 1, (H-1)*W) resident f32 accumulator (vertical diffs).
    wv_ref : (1, 1, H*W-1)   resident f32 accumulator (adjacent diffs, row
                             seams included; masked once in the JAX wrapper).
    """
    i = pl.program_id(1)

    @pl.when(i == 0)
    def _():
        hv_ref[...] = jnp.zeros_like(hv_ref)
        wv_ref[...] = jnp.zeros_like(wv_ref)

    # Logical index of the first image held by this (unclamped) block.
    start = (pl.program_id(0) * steps + i) * tb

    def accumulate(xc, first_row):
        xc = xc.astype(jnp.float32)                                  # (rows, H*W)
        if not exact:
            row = first_row + jax.lax.broadcasted_iota(
                jnp.int32, (xc.shape[0], 1), 0)
            xc = jnp.where(row < n, xc, 0.0)      # zero padded / duplicate images
        # Vertical neighbours: flat offset +W (always within the same image).
        dv = xc[:, w:] - xc[:, : hw - w]                             # (rows, (H-1)*W)
        # Adjacent neighbours: flat offset +1 (row seams masked in the wrapper).
        dh = xc[:, 1:] - xc[:, : hw - 1]                             # (rows, H*W-1)
        hv_ref[...] += jnp.sum(dv * dv, axis=0, keepdims=True)[None]
        wv_ref[...] += jnp.sum(dh * dh, axis=0, keepdims=True)[None]

    if n_chunks == 1:
        accumulate(x_ref[...], start)
    else:
        def chunk_body(ci, carry):
            off = pl.multiple_of(ci * tb_c, tb_c)
            accumulate(x_ref[pl.ds(off, tb_c), :], start + ci * tb_c)
            return carry

        jax.lax.fori_loop(0, n_chunks, chunk_body, 0)


def _tv_loss_ref(generated: jax.Array, tv_loss_weight: float = 1.0) -> jax.Array:
    """Pure-JAX reference mirroring the PyTorch TVLoss implementation."""
    b, c, h, w = generated.shape
    g = generated.astype(jnp.float32)
    count_h = c * (h - 1) * w
    count_w = c * h * (w - 1)
    h_tv = jnp.sum((g[:, :, 1:, :] - g[:, :, : h - 1, :]) ** 2)
    w_tv = jnp.sum((g[:, :, :, 1:] - g[:, :, :, : w - 1]) ** 2)
    return tv_loss_weight * 2.0 * (h_tv / count_h + w_tv / count_w) / b


@functools.partial(
    jax.jit, static_argnames=("tv_loss_weight", "block_bytes", "chunk_bytes"))
def tv_loss(generated: jax.Array, tv_loss_weight: float = 1.0, *,
            block_bytes: int | None = None,
            chunk_bytes: int | None = None) -> jax.Array:
    """Total-variation loss matching PyTorch TVLoss.forward semantics.

    generated: (B, C, H, W), any float dtype.  Returns scalar float32.
    """
    b, c, h, w = generated.shape
    if h < 2 or w < 2:
        # Degenerate sizes: mirror the reference (which divides by zero, as torch does).
        return _tv_loss_ref(generated, tv_loss_weight)

    n = b * c
    hw = h * w
    x = generated.reshape(n, hw)                 # free reshape: lane-dense, contiguous

    kind = _device_kind()
    n_splits = _num_core_splits(kind)
    gen_block, vmem_limit = _gen_params(kind)
    block_bytes = gen_block if block_bytes is None else block_bytes
    chunk_bytes = (1 * 1024 * 1024) if chunk_bytes is None else chunk_bytes

    itemsize = jnp.dtype(generated.dtype).itemsize
    tb, tb_c, n_chunks, steps = _block_sizes(
        n, hw, itemsize, n_splits, block_bytes, chunk_bytes)
    last_block = max(_cdiv(n, tb) - 1, 0)
    exact = (n_splits * steps * tb == n)

    lv = (h - 1) * w            # number of vertical-neighbour pairs per image
    lw = hw - 1                 # number of adjacent-neighbour pairs per image (seams incl.)

    kernel = functools.partial(
        _tv_kernel, n=n, w=w, hw=hw, tb=tb, tb_c=tb_c,
        n_chunks=n_chunks, steps=steps, exact=exact)

    acc_v, acc_w = pl.pallas_call(
        kernel,
        out_shape=(
            jax.ShapeDtypeStruct((n_splits, 1, lv), jnp.float32),
            jax.ShapeDtypeStruct((n_splits, 1, lw), jnp.float32),
        ),
        grid_spec=pltpu.PrefetchScalarGridSpec(
            num_scalar_prefetch=0,
            grid=(n_splits, steps),
            in_specs=[
                pl.BlockSpec(
                    (tb, hw),
                    lambda p, i: (jnp.minimum(p * steps + i, last_block), 0)),
            ],
            out_specs=[
                pl.BlockSpec((1, 1, lv), lambda p, i: (p, 0, 0)),
                pl.BlockSpec((1, 1, lw), lambda p, i: (p, 0, 0)),
            ],
        ),
        compiler_params=pltpu.CompilerParams(
            dimension_semantics=("parallel", "arbitrary"),
            vmem_limit_bytes=vmem_limit,
        ),
    )(x)

    # Final tiny reductions + row-seam masking (linear, so it commutes with the
    # in-kernel accumulation).
    h_tv = jnp.sum(acc_v)
    col_valid = (jnp.arange(lw, dtype=jnp.int32) % w) != (w - 1)
    w_tv = jnp.sum(jnp.where(col_valid, jnp.sum(acc_w, axis=(0, 1)), 0.0))

    # count_h = C*(H-1)*W ; count_w = C*H*(W-1)   (tensor_size in torch)
    count_h = float(c * (h - 1) * w)
    count_w = float(c * h * (w - 1))
    return tv_loss_weight * 2.0 * (h_tv / count_h + w_tv / count_w) / float(b)


if __name__ == "__main__":
    key = jax.random.PRNGKey(0)
    k1, k2, k3, k4 = jax.random.split(key, 4)

    # Primary shape implied by the module usage.
    x = jax.random.normal(k1, (2, 4, 16, 16), dtype=jnp.float32)
    out = jax.block_until_ready(tv_loss(x, tv_loss_weight=1.0))
    ref = _tv_loss_ref(x, 1.0)
    assert jnp.allclose(out, ref, rtol=1e-5, atol=1e-5), (out, ref)

    # Odd B*C, non-square H/W (exercises the ragged / clamped-block path on
    # multi-core parts).
    x2 = jax.random.normal(k2, (3, 1, 24, 16), dtype=jnp.float32)
    out2 = jax.block_until_ready(tv_loss(x2, tv_loss_weight=0.5))
    ref2 = _tv_loss_ref(x2, 0.5)
    assert jnp.allclose(out2, ref2, rtol=1e-5, atol=1e-5), (out2, ref2)

    # bf16 input: DMA'd in native dtype, cast to f32 in-kernel.
    x3 = jax.random.normal(k3, (2, 4, 16, 16), dtype=jnp.bfloat16)
    out3 = jax.block_until_ready(tv_loss(x3, tv_loss_weight=1.0))
    ref3 = _tv_loss_ref(x3, 1.0)
    assert jnp.allclose(out3, ref3, rtol=1e-4, atol=1e-4), (out3, ref3)

    # Tiny block/chunk overrides to exercise multi-step, multi-chunk and the
    # masked ragged-tail path at a small size.
    x4 = jax.random.normal(k4, (7, 5, 16, 16), dtype=jnp.float32)
    out4 = jax.block_until_ready(
        tv_loss(x4, tv_loss_weight=1.0, block_bytes=32 * 1024, chunk_bytes=8 * 1024))
    ref4 = _tv_loss_ref(x4, 1.0)
    assert jnp.allclose(out4, ref4, rtol=1e-5, atol=1e-5), (out4, ref4)

    print("KERNEL_OK")
</pallas_src>

<mosaic_0001>
module attributes {stable_mosaic.version = 11 : i64} {
  func.func @_tv_kernel(%arg0: i32, %arg1: i32, %arg2: memref<8x256xf32, #tpu.memory_space<vmem>>, %arg3: memref<1x1x240xf32, #tpu.memory_space<vmem>>, %arg4: memref<1x1x255xf32, #tpu.memory_space<vmem>>) attributes {dimension_semantics = [#tpu.dimension_semantics<parallel>, #tpu.dimension_semantics<arbitrary>], iteration_bounds = array<i64: 1, 1>, scalar_prefetch = 0 : i64, scratch_operands = 0 : i64, tpu.core_type = #tpu.core_type<tc>, window_params = [{transform_indices = @transform_0, window_bounds = array<i64: 8, 256>}, {transform_indices = @transform_1, window_bounds = array<i64: 1, 1, 240>}, {transform_indices = @transform_2, window_bounds = array<i64: 1, 1, 255>}]} {
    %c0_i32 = arith.constant 0 : i32
    %0 = arith.cmpi eq, %arg1, %c0_i32 : i32
    %1 = arith.extui %0 : i1 to i32
    %c0_i32_0 = arith.constant 0 : i32
    %2 = arith.cmpi ne, %1, %c0_i32_0 : i32
    scf.if %2 {
      %cst_15 = arith.constant 0.000000e+00 : f32
      %24 = vector.broadcast %cst_15 : f32 to vector<1x1x240xf32>
      %c0_16 = arith.constant 0 : index
      %c0_17 = arith.constant 0 : index
      %c0_18 = arith.constant 0 : index
      %25 = vector.load %arg3[%c0_16, %c0_17, %c0_18] : memref<1x1x240xf32, #tpu.memory_space<vmem>>, vector<1x1x240xf32>
      tpu.vector_store %arg3[%c0_16, %c0_17, %c0_18], %24 {strides = array<i32>} : memref<1x1x240xf32, #tpu.memory_space<vmem>>, vector<1x1x240xf32>,
      %cst_19 = arith.constant 0.000000e+00 : f32
      %26 = vector.broadcast %cst_19 : f32 to vector<1x1x255xf32>
      %c0_20 = arith.constant 0 : index
      %c0_21 = arith.constant 0 : index
      %c0_22 = arith.constant 0 : index
      %27 = vector.load %arg4[%c0_20, %c0_21, %c0_22] : memref<1x1x255xf32, #tpu.memory_space<vmem>>, vector<1x1x255xf32>
      tpu.vector_store %arg4[%c0_20, %c0_21, %c0_22], %26 {strides = array<i32>} : memref<1x1x255xf32, #tpu.memory_space<vmem>>, vector<1x1x255xf32>,
    } else {
    }
    %c0 = arith.constant 0 : index
    %c0_1 = arith.constant 0 : index
    %3 = vector.load %arg2[%c0, %c0_1] : memref<8x256xf32, #tpu.memory_space<vmem>>, vector<8x256xf32>
    %4 = vector.extract_strided_slice %3 {offsets = [0, 16], sizes = [8, 240], strides = [1, 1]} : vector<8x256xf32> to vector<8x240xf32>
    %5 = vector.extract_strided_slice %3 {offsets = [0, 0], sizes = [8, 240], strides = [1, 1]} : vector<8x256xf32> to vector<8x240xf32>
    %6 = arith.subf %4, %5 : vector<8x240xf32>
    %7 = vector.extract_strided_slice %3 {offsets = [0, 1], sizes = [8, 255], strides = [1, 1]} : vector<8x256xf32> to vector<8x255xf32>
    %8 = vector.extract_strided_slice %3 {offsets = [0, 0], sizes = [8, 255], strides = [1, 1]} : vector<8x256xf32> to vector<8x255xf32>
    %9 = arith.subf %7, %8 : vector<8x255xf32>
    %c0_2 = arith.constant 0 : index
    %c0_3 = arith.constant 0 : index
    %c0_4 = arith.constant 0 : index
    %10 = vector.load %arg3[%c0_2, %c0_3, %c0_4] : memref<1x1x240xf32, #tpu.memory_space<vmem>>, vector<1x1x240xf32>
    %11 = arith.mulf %6, %6 : vector<8x240xf32>
    %cst = arith.constant dense<0.000000e+00> : vector<240xf32>
    %12 = vector.multi_reduction <add>, %11, %cst [0] : vector<8x240xf32> to vector<240xf32>
    %13 = vector.shape_cast %12 : vector<240xf32> to vector<1x240xf32>
    %14 = vector.shape_cast %13 : vector<1x240xf32> to vector<1x1x240xf32>
    %15 = arith.addf %10, %14 : vector<1x1x240xf32>
    %c0_5 = arith.constant 0 : index
    %c0_6 = arith.constant 0 : index
    %c0_7 = arith.constant 0 : index
    %16 = vector.load %arg3[%c0_5, %c0_6, %c0_7] : memref<1x1x240xf32, #tpu.memory_space<vmem>>, vector<1x1x240xf32>
    tpu.vector_store %arg3[%c0_5, %c0_6, %c0_7], %15 {strides = array<i32>} : memref<1x1x240xf32, #tpu.memory_space<vmem>>, vector<1x1x240xf32>,
    %c0_8 = arith.constant 0 : index
    %c0_9 = arith.constant 0 : index
    %c0_10 = arith.constant 0 : index
    %17 = vector.load %arg4[%c0_8, %c0_9, %c0_10] : memref<1x1x255xf32, #tpu.memory_space<vmem>>, vector<1x1x255xf32>
    %18 = arith.mulf %9, %9 : vector<8x255xf32>
    %cst_11 = arith.constant dense<0.000000e+00> : vector<255xf32>
    %19 = vector.multi_reduction <add>, %18, %cst_11 [0] : vector<8x255xf32> to vector<255xf32>
    %20 = vector.shape_cast %19 : vector<255xf32> to vector<1x255xf32>
    %21 = vector.shape_cast %20 : vector<1x255xf32> to vector<1x1x255xf32>
    %22 = arith.addf %17, %21 : vector<1x1x255xf32>
    %c0_12 = arith.constant 0 : index
    %c0_13 = arith.constant 0 : index
    %c0_14 = arith.constant 0 : index
    %23 = vector.load %arg4[%c0_12, %c0_13, %c0_14] : memref<1x1x255xf32, #tpu.memory_space<vmem>>, vector<1x1x255xf32>
    tpu.vector_store %arg4[%c0_12, %c0_13, %c0_14], %22 {strides = array<i32>} : memref<1x1x255xf32, #tpu.memory_space<vmem>>, vector<1x1x255xf32>,
    return
  }
  func.func @transform_0(%arg0: i32, %arg1: i32) -> (i32, i32) {
    %c1_i32 = arith.constant 1 : i32
    %0 = arith.muli %arg0, %c1_i32 : i32
    %1 = arith.addi %0, %arg1 : i32
    %c0_i32 = arith.constant 0 : i32
    %2 = arith.minsi %1, %c0_i32 : i32
    %c0_i32_0 = arith.constant 0 : i32
    %c0_i32_1 = arith.constant 0 : i32
    return %2, %c0_i32_0 : i32, i32
  }
  func.func @transform_1(%arg0: i32, %arg1: i32) -> (i32, i32, i32) {
    %c0_i32 = arith.constant 0 : i32
    %c0_i32_0 = arith.constant 0 : i32
    %c0_i32_1 = arith.constant 0 : i32
    return %arg0, %c0_i32, %c0_i32_0 : i32, i32, i32
  }
  func.func @transform_2(%arg0: i32, %arg1: i32) -> (i32, i32, i32) {
    %c0_i32 = arith.constant 0 : i32
    %c0_i32_0 = arith.constant 0 : i32
    %c0_i32_1 = arith.constant 0 : i32
    return %arg0, %c0_i32, %c0_i32_0 : i32, i32, i32
  }
}

</mosaic_0001>

<llo_original>
// kernel: tv_loss.1
$region0: #{tv_loss.1}
  #allocation0 [shape = 'u32[]', space=smem, size = 0x4, offset = 0x4, fixed_abs, tag = 'smem constant byte address 0x4 - core index']
  #allocation1 [shape = 'u32[144,128]{1,0:T(1,128)}', space=vmem, size = 0x12000, scoped, tag = 'internal scratch']
  %s0 = inlined_call_operand.hbm [shape: f32[8,256], index: 0, kind: input, shape index: {}]
  %s1 = inlined_call_operand.hbm [shape: f32[1,1,240], index: 1, kind: output, shape index: {0}]
  %s2 = inlined_call_operand.hbm [shape: f32[1,1,255], index: 2, kind: output, shape index: {1}]
  %3 = xla_tuple %s1, %s2
  %s4 = sld [smem:[#allocation0]]
  $region30: #{tv_loss.1} parent=0
    _
  %s6 = ssub.s32 1, %s4
  %s7 = scalar_select 0, %s6, %s4
  $region1: #{tv_loss.1} parent=0
    #allocation2 [shape = 'u8[8192]{0}', space=vmem, size = 0x2000, scoped, tag = 'input window, operand 0, single buffered']
    #allocation3 [shape = 's32[1]{0}', space=sflag, size = 0x4, scoped, tag = 'scoped memory for tv_loss.1']
    #allocation4 [shape = 's32[1]{0}', space=sflag, size = 0x4, scoped, tag = 'scoped memory for tv_loss.1']
    #allocation5 [shape = 'u8[1024]{0}', space=vmem, size = 0x400, scoped, tag = 'output window, operand 0, single buffered']
    #allocation6 [shape = 'u8[1024]{0}', space=vmem, size = 0x400, scoped, tag = 'output window, operand 1, single buffered']
    #allocation7 [shape = 's32[1]{0}', space=sflag, size = 0x4, scoped, tag = 'scoped memory for tv_loss.1']
    %8 = vsyncpa [#allocation3], 0
    %9 = vsyncpa [#allocation4], 0
    %10 = vsyncpa [#allocation7], 0
    // Predicated region
    $region2: #{tv_loss.1} parent=1 // pred_check
      _
    $region3: #{tv_loss.1} parent=1 // pred_check_branch
      %12 = sbr.rel (0) target = $region5
    $region4: #{tv_loss.1} parent=1 // pred_region
      %s13 = sadd.s32 0, 0
      %p14 = scmp.lt.s32.totalorder %s13, 0
      %s15 = scalar_select %p14, %s13, 0
      %s17 = ssub.s32 256, 256
      %18 = vsyncadd [#allocation3], %s17
      %s19 = smul.addr %s15, 2
      %s20 = smul.addr %s19, 128
      %s21 = scalar_lea.hbm %s0, %s20
      %s23 = sshll.u32 [#allocation2], 4
      %s24 = int_to_ptr.vmem [resolvable:$true] %s23
      %26 = dma.hbm_to_vmem [thread:$0]  %s21, 256, %s24, [#allocation3]
    $region5: #{tv_loss.1} parent=1 // pred_fallthru
      _
    // Predicated region
    $region6: #{tv_loss.1} parent=1 // pred_check
      _
    $region7: #{tv_loss.1} parent=1 // pred_check_branch
      %28 = sbr.rel (0) target = $region9
    $region8: #{tv_loss.1} parent=1 // pred_region
      %29 = dma.done [#allocation3], 256
    $region9: #{tv_loss.1} parent=1 // pred_fallthru
      _
    %s30 = sadd.s32 0, 0
    %p31 = scmp.lt.s32.totalorder %s30, 0
    %s32 = scalar_select %p31, %s30, 0
    %p33 = scmp.eq.s32.totalorder 0, 0
    // Predicated region
    $region10: #{tv_loss.1} parent=1 // pred_check
      %p34 = pneg %p33
    $region11: #{tv_loss.1} parent=1 // pred_check_branch
      %36 = sbr.rel (%p34) target = $region13
    $region12: #{tv_loss.1} parent=1 // pred_region
      %v37 = vlaneseq
      %vm38 = vcmp.ge.s32.totalorder %v37, 0
      %vm39 = vcmp.lt.s32.totalorder %v37, 240
      %vm40 = vmand %vm38, %vm39
      %41 = vst.msk [vmem:[#allocation5] sm:$0x3] %vm40, 0.0
      %vm42 = vcmp.lt.s32.totalorder %v37, 255
      %vm43 = vmand %vm38, %vm42
      %44 = vst.msk [vmem:[#allocation6] sm:$0x3] %vm43, 0.0
    $region13: #{tv_loss.1} parent=1 // pred_fallthru
      _
    %v45 = vld [vmem:[#allocation2] sm:$0xff]
    %v46 = vld [vmem:[#allocation2 + $0x8] sm:$0xff]
    %49 = vrot.lane.b32.xlu0 %v45, 16
    %v50 = vpop.permute.xlu0 %49
    %51 = vrot.lane.b32.xlu0 %v46, 16
    %v52 = vpop.permute.xlu0 %51
    %vm53 = vcmask 130048
    %v54 = vsel %vm53, %v50, %v52
    %v57 = vsub.f32 %v45, %v50
    %v58 = vsub.f32 %v46, %v54
    %59 = vrot.lane.b32.xlu0 %v45, 1
    %v60 = vpop.permute.xlu0 %59
    %61 = vrot.lane.b32.xlu0 %v46, 1
    %v62 = vpop.permute.xlu0 %61
    %vm63 = vcmask 7168
    %v64 = vsel %vm63, %v60, %v62
    %v67 = vsub.f32 %v45, %v60
    %v68 = vsub.f32 %v46, %v64
    %v69 = vld [vmem:[#allocation5] sm:$0x3]
    %v70 = vmul.f32 %v57, %v57
    %v71 = vmul.f32 %v58, %v58
    %vm72 = vcmask 1047680
    %v73 = vsel %vm72, %v70, 0.0
    %v74 = vrot.slane %v73, 4
    %v75 = vadd.f32 %v73, %v74
    %v76 = vrot.slane %v75, 2
    %v77 = vadd.f32 %v75, %v76
    %v78 = vrot.slane %v77, 1
    %v79 = vadd.f32 %v77, %v78
    %v80 = vrot.slane %v71, 4
    %v81 = vadd.f32 %v71, %v80
    %v82 = vrot.slane %v81, 2
    %v83 = vadd.f32 %v81, %v82
    %v84 = vrot.slane %v83, 1
    %v85 = vadd.f32 %v83, %v84
    %v88 = vcombine.low %v79, %v85
    %v90 = vunpack.c.l.s4 1966171168
    %v91 = vunpack.c.0.s8 %v90
    %v92 = vlaneseq
    %v93 = vshrl.u32 %v92, 7
    %v94 = vsub.s32 %v91, %v93
    %v95 = vrot.slane %v88, %v94
    %v97 = vunpack.c.l.s4 1966171168
    %v98 = vunpack.c.0.s8 %v97
    %v99 = vlaneseq
    %v100 = vshrl.u32 %v99, 7
    %v101 = vsub.s32 %v98, %v100
    %v102 = vrot.slane %v95, %v101
    %103 = vrot.lane.b32.xlu0 %v102, 112
    %v104 = vpop.permute.xlu0 %103
    %v105 = vrot.slane %v104, 1
    %vm106 = vcmask 916480
    %v107 = vsel %vm106, %v104, %v105
    %v109 = vadd.f32 %v69, %v107
    %v110 = vlaneseq
    %vm111 = vcmp.ge.s32.totalorder %v110, 0
    %vm112 = vcmp.lt.s32.totalorder %v110, 240
    %vm113 = vmand %vm111, %vm112
    %114 = vst.msk [vmem:[#allocation5] sm:$0x3] %vm113, %v109
    %v115 = vld [vmem:[#allocation6] sm:$0x3]
    %v116 = vmul.f32 %v67, %v67
    %v117 = vmul.f32 %v68, %v68
    %vm118 = vcmask 1047560
    %v119 = vsel %vm118, %v116, 0.0
    %v120 = vrot.slane %v119, 4
    %v121 = vadd.f32 %v119, %v120
    %v122 = vrot.slane %v121, 2
    %v123 = vadd.f32 %v121, %v122
    %v124 = vrot.slane %v123, 1
    %v125 = vadd.f32 %v123, %v124
    %v126 = vrot.slane %v117, 4
    %v127 = vadd.f32 %v117, %v126
    %v128 = vrot.slane %v127, 2
    %v129 = vadd.f32 %v127, %v128
    %v130 = vrot.slane %v129, 1
    %v131 = vadd.f32 %v129, %v130
    %v134 = vcombine.low %v125, %v131
    %v136 = vunpack.c.l.s4 1966171168
    %v137 = vunpack.c.0.s8 %v136
    %v138 = vlaneseq
    %v139 = vshrl.u32 %v138, 7
    %v140 = vsub.s32 %v137, %v139
    %v141 = vrot.slane %v134, %v140
    %v143 = vunpack.c.l.s4 1966171168
    %v144 = vunpack.c.0.s8 %v143
    %v145 = vlaneseq
    %v146 = vshrl.u32 %v145, 7
    %v147 = vsub.s32 %v144, %v146
    %v148 = vrot.slane %v141, %v147
    %149 = vrot.lane.b32.xlu0 %v148, 127
    %v150 = vpop.permute.xlu0 %149
    %v151 = vrot.slane %v150, 1
    %vm152 = vcmask 1039360
    %v153 = vsel %vm152, %v150, %v151
    %v155 = vadd.f32 %v115, %v153
    %vm156 = vcmp.lt.s32.totalorder %v110, 255
    %vm157 = vmand %vm111, %vm156
    %158 = vst.msk [vmem:[#allocation6] sm:$0x3] %vm157, %v155
    // Predicated region
    $region14: #{tv_loss.1} parent=1 // pred_check
      _
    $region15: #{tv_loss.1} parent=1 // pred_check_branch
      %160 = sbr.rel (0) target = $region17
    $region16: #{tv_loss.1} parent=1 // pred_region
      %s162 = ssub.s32 32, 32
      %163 = vsyncadd [#allocation4], %s162
      %s165 = sshll.u32 [#allocation5], 4
      %s166 = int_to_ptr.vmem [resolvable:$true] %s165
      %168 = dma.vmem_to_hbm [thread:$0]  %s166, 32, %s1, [#allocation4]
    $region17: #{tv_loss.1} parent=1 // pred_fallthru
      _
    // Predicated region
    $region18: #{tv_loss.1} parent=1 // pred_check
      _
    $region19: #{tv_loss.1} parent=1 // pred_check_branch
      %170 = sbr.rel (0) target = $region21
    $region20: #{tv_loss.1} parent=1 // pred_region
      %s172 = ssub.s32 32, 32
      %173 = vsyncadd [#allocation7], %s172
      %s175 = sshll.u32 [#allocation6], 4
      %s176 = int_to_ptr.vmem [resolvable:$true] %s175
      %178 = dma.vmem_to_hbm [thread:$0]  %s176, 32, %s2, [#allocation7]
    $region21: #{tv_loss.1} parent=1 // pred_fallthru
      _
    // Predicated region
    $region22: #{tv_loss.1} parent=1 // pred_check
      _
    $region23: #{tv_loss.1} parent=1 // pred_check_branch
      %180 = sbr.rel (0) target = $region25
    $region24: #{tv_loss.1} parent=1 // pred_region
      %181 = dma.done [#allocation4], 32
    $region25: #{tv_loss.1} parent=1 // pred_fallthru
      _
    // Predicated region
    $region26: #{tv_loss.1} parent=1 // pred_check
      _
    $region27: #{tv_loss.1} parent=1 // pred_check_branch
      %183 = sbr.rel (0) target = $region29
    $region28: #{tv_loss.1} parent=1 // pred_region
      %184 = dma.done [#allocation7], 32
    $region29: #{tv_loss.1} parent=1 // pred_fallthru
      _
    %185 = vsyncpa [#allocation3], 1
    %186 = vsyncpa [#allocation4], 1
    %187 = vsyncpa [#allocation7], 1

</llo_original>
